<compile_context>
chip_gen: v6e
topology: v6e:2x2x1
jax: 0.10.0
libtpu: 0.0.40
codegen_flags: <defaults>
</compile_context>

<pallas_src>
import jax
import jax.numpy as jnp
from jax.experimental import pallas as pl
from jax.experimental.pallas import tpu as pltpu

_LANE = 128
_TARGET_BLOCK_BYTES = 4 * 1024 * 1024   # ~4 MiB blocks -> ~16 MiB pipelined VMEM
_VMEM_LIMIT_BYTES = 32 * 1024 * 1024    # > v5e 16 MiB default, < v7x 64 MiB physical


def _round_up(x: int, m: int) -> int:
    return ((x + m - 1) // m) * m


def _sublane_min(dtype) -> int:
    # Native packed tile height: 8 rows for 4-byte, 16 for 2-byte, 32 for 1-byte.
    return max(8, 32 // jnp.dtype(dtype).itemsize)


def _lane_dense_2d(x):
    """Reshape to (rows, cols) with cols a multiple of 128 whenever possible
    (unmasked lane-dense stores).  Elementwise semantics are reshape-invariant.
    Fallback keeps the full last dim (full-extent last block dim is legal)."""
    size = x.size
    if x.ndim >= 2 and x.shape[-1] % _LANE == 0:
        return x.reshape(-1, x.shape[-1])
    for c in (2048, 1024, 512, 256, _LANE):
        if size % c == 0:
            return x.reshape(-1, c)
    if x.ndim >= 2:
        return x.reshape(-1, x.shape[-1])
    return x.reshape(1, size)


def _pick_row_tile(rows: int, cols: int, itemsize: int, sub: int) -> int:
    """Bytes-aware row tile: ~_TARGET_BLOCK_BYTES per block, sublane-aligned,
    and >= 2 grid steps when there are enough rows (v7x megacore sharding)."""
    if rows <= sub:
        return rows                                   # full-extent block, always legal
    tb = (_TARGET_BLOCK_BYTES // max(1, cols * itemsize)) // sub * sub
    tb = max(sub, tb)
    tb = min(tb, _round_up(pl.cdiv(rows, 2), sub))    # keep at least 2 grid steps
    tb = min(tb, _round_up(rows, sub))
    return tb


# --------------------------------------------------------------------------
# Backward kernel: grad_input = -alpha * grad_output
# --------------------------------------------------------------------------
def _neg_scale_kernel(alpha_ref, g_ref, o_ref):
    # alpha lives in SMEM (f32); cast the scalar once and multiply in the
    # grad's native dtype (no f32 round-trip, no extra vreg pressure).
    neg_alpha = (-alpha_ref[0]).astype(o_ref.dtype)
    o_ref[...] = neg_alpha * g_ref[...]


def _grl_backward_pallas(g, alpha):
    orig_shape = g.shape
    g2 = _lane_dense_2d(g)
    rows, cols = g2.shape
    itemsize = jnp.dtype(g2.dtype).itemsize
    sub = _sublane_min(g2.dtype)
    tb = _pick_row_tile(rows, cols, itemsize, sub)
    nbytes = g2.size * itemsize
    alpha_smem = jnp.asarray(alpha, jnp.float32).reshape(1)

    out = pl.pallas_call(
        _neg_scale_kernel,
        out_shape=jax.ShapeDtypeStruct((rows, cols), g.dtype),
        grid=(pl.cdiv(rows, tb),),
        in_specs=[
            # scalar alpha: resident in SMEM across all grid steps
            pl.BlockSpec(memory_space=pltpu.MemorySpace.SMEM),
            pl.BlockSpec((tb, cols), lambda i: (i, 0)),
        ],
        out_specs=pl.BlockSpec((tb, cols), lambda i: (i, 0)),
        compiler_params=pltpu.CompilerParams(
            dimension_semantics=("parallel",),
            vmem_limit_bytes=_VMEM_LIMIT_BYTES,
        ),
        cost_estimate=pl.CostEstimate(
            flops=g2.size, transcendentals=0, bytes_accessed=2 * nbytes),
    )(alpha_smem, g2)
    return out.reshape(orig_shape)


# --------------------------------------------------------------------------
# GradientReversalLayer = identity forward + (-alpha * g) backward
# --------------------------------------------------------------------------
@jax.custom_vjp
def gradient_reversal(x, alpha):
    # Forward is a pure identity (x.view_as(x)) -> no kernel, no HBM traffic.
    return x


def _grl_fwd(x, alpha):
    return x, alpha


def _grl_bwd(alpha, g):
    # alpha is non-differentiable in the PyTorch module -> zero cotangent.
    return _grl_backward_pallas(g, alpha), jnp.zeros_like(jnp.asarray(alpha))


gradient_reversal.defvjp(_grl_fwd, _grl_bwd)


# --------------------------------------------------------------------------
# Demo / self-check
# --------------------------------------------------------------------------
if __name__ == "__main__":
    key = jax.random.PRNGKey(0)
    kx, kg, kx2, kg2 = jax.random.split(key, 4)
    alpha = jnp.float32(1.5)

    # Case 1: f32, lane-aligned hidden dim  [batch, seq, hidden] = [2, 8, 256].
    x = jax.random.normal(kx, (2, 8, 256), jnp.float32)
    y, vjp_fn = jax.vjp(lambda t: gradient_reversal(t, alpha), x)
    ct = jax.random.normal(kg, x.shape, jnp.float32)
    (gx,) = vjp_fn(ct)
    gx = jax.block_until_ready(gx)
    assert y.shape == x.shape and y.dtype == x.dtype
    assert jnp.array_equal(y, x)                       # forward is exact identity
    assert jnp.allclose(gx, -alpha * ct, atol=1e-6, rtol=1e-6)

    # Case 2: bf16 grads, non-128-multiple hidden dim -> exercises the
    # lane-dense reshape path and the 16-row sublane alignment for packed dtypes.
    x2 = jax.random.normal(kx2, (4, 8, 96), jnp.float32).astype(jnp.bfloat16)
    y2, vjp_fn2 = jax.vjp(lambda t: gradient_reversal(t, alpha), x2)
    ct2 = jax.random.normal(kg2, x2.shape, jnp.float32).astype(jnp.bfloat16)
    (gx2,) = vjp_fn2(ct2)
    gx2 = jax.block_until_ready(gx2)
    ref2 = (-alpha * ct2.astype(jnp.float32))
    assert y2.dtype == x2.dtype and jnp.array_equal(y2, x2)
    assert jnp.allclose(gx2.astype(jnp.float32), ref2, atol=2e-2, rtol=2e-2)

    print("KERNEL_OK")
</pallas_src>

<mosaic_0001>
module attributes {stable_mosaic.version = 11 : i64} {
  func.func @_neg_scale_kernel(%arg0: i32, %arg1: memref<1xf32, #tpu.memory_space<smem>>, %arg2: memref<8x256xf32, #tpu.memory_space<vmem>>, %arg3: memref<8x256xf32, #tpu.memory_space<vmem>>) attributes {dimension_semantics = [#tpu.dimension_semantics<parallel>], iteration_bounds = array<i64: 2>, scalar_prefetch = 0 : i64, scratch_operands = 0 : i64, tpu.core_type = #tpu.core_type<tc>, window_params = [{transform_indices = @transform_0, window_bounds = array<i64: 1>}, {transform_indices = @transform_1, window_bounds = array<i64: 8, 256>}, {transform_indices = @transform_2, window_bounds = array<i64: 8, 256>}]} {
    %c0 = arith.constant 0 : index
    %0 = memref.load %arg1[%c0] : memref<1xf32, #tpu.memory_space<smem>>
    %cst = arith.constant 0.000000e+00 : f32
    %1 = arith.subf %cst, %0 : f32
    %c0_0 = arith.constant 0 : index
    %c0_1 = arith.constant 0 : index
    %2 = vector.load %arg2[%c0_0, %c0_1] : memref<8x256xf32, #tpu.memory_space<vmem>>, vector<8x256xf32>
    %3 = vector.broadcast %1 : f32 to vector<8x256xf32>
    %4 = arith.mulf %3, %2 : vector<8x256xf32>
    %c0_2 = arith.constant 0 : index
    %c0_3 = arith.constant 0 : index
    %5 = vector.load %arg3[%c0_2, %c0_3] : memref<8x256xf32, #tpu.memory_space<vmem>>, vector<8x256xf32>
    tpu.vector_store %arg3[%c0_2, %c0_3], %4 {strides = array<i32>} : memref<8x256xf32, #tpu.memory_space<vmem>>, vector<8x256xf32>,
    return
  }
  func.func @transform_0(%arg0: i32) -> i32 {
    %c0_i32 = arith.constant 0 : i32
    %c0_i32_0 = arith.constant 0 : i32
    return %c0_i32 : i32
  }
  func.func @transform_1(%arg0: i32) -> (i32, i32) {
    %c0_i32 = arith.constant 0 : i32
    %c0_i32_0 = arith.constant 0 : i32
    return %arg0, %c0_i32 : i32, i32
  }
  func.func @transform_2(%arg0: i32) -> (i32, i32) {
    %c0_i32 = arith.constant 0 : i32
    %c0_i32_0 = arith.constant 0 : i32
    return %arg0, %c0_i32 : i32, i32
  }
}

</mosaic_0001>

<llo_original>
// kernel: tpu_custom_call.1
$region0: #{tpu_custom_call.1}
  #allocation0 [shape = 'u32[]', space=smem, size = 0x4, offset = 0x4, fixed_abs, tag = 'smem constant byte address 0x4 - core index']
  #allocation1 [shape = 'u32[144,128]{1,0:T(1,128)}', space=vmem, size = 0x12000, scoped, tag = 'internal scratch']
  #allocation2 [shape = 'f32[1]{0:T(128)S(6)}', space=smem, size = 0x200, scoped, tag = 'scoped memory for tpu_custom_call.1']
  %s0 = inlined_call_operand.<no memory space> [shape: f32[1], index: 0, kind: input, shape index: {}]
  %s1 = inlined_call_operand.hbm [shape: f32[16,256], index: 1, kind: input, shape index: {}]
  %s2 = inlined_call_operand.hbm [shape: f32[16,256], index: 2, kind: output, shape index: {}]
  %s3 = sld [smem:[#allocation0]]
  $region45: #{tpu_custom_call.1} parent=0
    _
  %s5 = ssub.s32 1, %s3
  %s6 = scalar_select 0, %s5, %s3
  %7 = sst [smem:[#allocation2]] %s0
  $region1: #{tpu_custom_call.1} parent=0
    #allocation3 [shape = 'u8[16384]{0}', space=vmem, size = 0x4000, scoped, tag = 'input window, operand 1']
    #allocation4 [shape = 's32[2]{0}', space=sflag, size = 0x8, scoped, tag = 'scoped memory for tpu_custom_call.1']
    #allocation5 [shape = 's32[2]{0}', space=sflag, size = 0x8, scoped, tag = 'scoped memory for tpu_custom_call.1']
    #allocation6 [shape = 'u8[16384]{0}', space=vmem, size = 0x4000, scoped, tag = 'output window, operand 0']
    %8 = vsyncpa [#allocation4], 0
    %s9 = scalar_lea.sflag [#allocation4], 1
    %10 = vsyncpa %s9, 0
    %11 = vsyncpa [#allocation5], 0
    %s12 = scalar_lea.sflag [#allocation5], 1
    %13 = vsyncpa %s12, 0
    loop: start=0, step=1, limit=4
    $region2: #{tpu_custom_call.1} parent=1 // loop_pre_header
      _
    $region3: #{tpu_custom_call.1} parent=1 // loop_header
      %s15 = sphi 0, %s19
      %p16 = scmp.ge.s32.totalorder %s15, 4
      %s23 = sphi 0, %s23
      %s25 = sphi 0, %s23
      %s26 = sphi 0, %s25
      %s40 = sphi 0, %s26
      %s46 = sphi 0, %s48
      %s49 = sphi 0, %s46
      %s50 = sphi 0, %s49
      %s66 = sphi 0, %s50
      %s72 = sphi 0, %s74
      %s75 = sphi 0, %s72
      %s76 = sphi 0, %s75
      %s92 = sphi 0, %s76
    $region4: #{tpu_custom_call.1} parent=1 // loop_header_branch
      %18 = sbr.rel (%p16) target = $region8
    $region5: #{tpu_custom_call.1} parent=1 // loop_body
      %s20 = ssub.s32 %s15, 1
      %s21 = ssub.s32 %s15, 2
      %s22 = sadd.s32 %s15, 1
      %s24 = sadd.s32 %s23, 1
      %p27 = scmp.eq.s32.totalorder %s15, 1
      %p28 = scmp.ne.s32.totalorder %s23, %s25
      %p29 = scmp.eq.s32.totalorder %s15, 0
      %p30 = por %p28, %p29
      %p31 = scmp.ne.s32.totalorder %s23, %s25
      %p32 = scmp.eq.s32.totalorder %s20, 1
      %p33 = por %p31, %p32
      %p34 = scmp.ne.s32.totalorder %s25, %s26
      %p35 = scmp.eq.s32.totalorder %s20, 0
      %p36 = por %p34, %p35
      %p37 = scmp.ne.s32.totalorder %s25, %s26
      %p38 = scmp.eq.s32.totalorder %s21, 1
      %p39 = por %p37, %p38
      %p41 = scmp.ne.s32.totalorder %s26, %s40
      %p42 = scmp.eq.s32.totalorder %s21, 0
      %p43 = por %p41, %p42
      %s44 = ssub.s32 %s15, %s22
      %p45 = scmp.eq.s32.totalorder %s44, 0
      %s47 = sadd.s32 %s46, 1
      %s48 = scalar_select %p45, %s46, %s47
      %p51 = pneg %p45
      %p52 = scmp.eq.s32.totalorder %s15, 1
      %p53 = por %p51, %p52
      %p54 = scmp.ne.s32.totalorder %s46, %s49
      %p55 = scmp.eq.s32.totalorder %s15, 0
      %p56 = por %p54, %p55
      %p57 = scmp.ne.s32.totalorder %s46, %s49
      %p58 = scmp.eq.s32.totalorder %s20, 1
      %p59 = por %p57, %p58
      %p60 = scmp.ne.s32.totalorder %s49, %s50
      %p61 = scmp.eq.s32.totalorder %s20, 0
      %p62 = por %p60, %p61
      %p63 = scmp.ne.s32.totalorder %s49, %s50
      %p64 = scmp.eq.s32.totalorder %s21, 1
      %p65 = por %p63, %p64
      %p67 = scmp.ne.s32.totalorder %s50, %s66
      %p68 = scmp.eq.s32.totalorder %s21, 0
      %p69 = por %p67, %p68
      %s70 = ssub.s32 %s15, %s22
      %p71 = scmp.eq.s32.totalorder %s70, 0
      %s73 = sadd.s32 %s72, 1
      %s74 = scalar_select %p71, %s72, %s73
      %p77 = pneg %p71
      %p78 = scmp.eq.s32.totalorder %s15, 1
      %p79 = por %p77, %p78
      %p80 = scmp.ne.s32.totalorder %s72, %s75
      %p81 = scmp.eq.s32.totalorder %s15, 0
      %p82 = por %p80, %p81
      %p83 = scmp.ne.s32.totalorder %s72, %s75
      %p84 = scmp.eq.s32.totalorder %s20, 1
      %p85 = por %p83, %p84
      %p86 = scmp.ne.s32.totalorder %s75, %s76
      %p87 = scmp.eq.s32.totalorder %s20, 0
      %p88 = por %p86, %p87
      %p89 = scmp.ne.s32.totalorder %s75, %s76
      %p90 = scmp.eq.s32.totalorder %s21, 1
      %p91 = por %p89, %p90
      %p93 = scmp.ne.s32.totalorder %s76, %s92
      %p94 = scmp.eq.s32.totalorder %s21, 0
      %p95 = por %p93, %p94
      %p96 = scmp.le.s32.totalorder 1, %s15
      %p97 = scmp.lt.s32.totalorder %s15, 3
      %p98 = pnand %p96, %p97
      %p99 = pneg %p98
      // Predicated region
      $region9: #{tpu_custom_call.1} parent=5 // pred_check
        _
      $region10: #{tpu_custom_call.1} parent=5 // pred_check_branch
        %101 = sbr.rel (%p98) target = $region12
      $region11: #{tpu_custom_call.1} parent=5 // pred_region
        %s102 = ssub.s32 %s15, 1
        // Predicated region
        $region13: #{tpu_custom_call.1} parent=11 // pred_check
          %p103 = pneg %p36
        $region14: #{tpu_custom_call.1} parent=11 // pred_check_branch
          %105 = sbr.rel (%p103) target = $region16
        $region15: #{tpu_custom_call.1} parent=11 // pred_region
          _
        $region16: #{tpu_custom_call.1} parent=11 // pred_fallthru
          _
      $region12: #{tpu_custom_call.1} parent=5 // pred_fallthru
        _
      %p106 = scmp.lt.s32.totalorder %s15, 2
      // Predicated region
      $region17: #{tpu_custom_call.1} parent=5 // pred_check
        %p107 = pneg %p106
      $region18: #{tpu_custom_call.1} parent=5 // pred_check_branch
        %109 = sbr.rel (%p107) target = $region20
      $region19: #{tpu_custom_call.1} parent=5 // pred_region
        // Predicated region
        $region21: #{tpu_custom_call.1} parent=19 // pred_check
          %p110 = pneg %p56
        $region22: #{tpu_custom_call.1} parent=19 // pred_check_branch
          %112 = sbr.rel (%p110) target = $region24
        $region23: #{tpu_custom_call.1} parent=19 // pred_region
          %s113 = sand.u32 %s46, 1
          %s114 = scalar_lea.sflag [#allocation4], %s113
          %s115 = sand.u32 %s46, 1
          %s116 = smul.addr %s115, 16
          %s117 = scalar_lea.vmem [#allocation3], %s116
          %s119 = ssub.s32 256, 256
          %120 = vsyncadd %s114, %s119
          %s121 = smul.addr %s15, 2
          %s122 = smul.addr %s121, 128
          %s123 = scalar_lea.hbm %s1, %s122
          %s125 = sshll.u32 %s117, 4
          %s126 = int_to_ptr.vmem [resolvable:$true] %s125
          %128 = dma.hbm_to_vmem [thread:$0]  %s123, 256, %s126, %s114
        $region24: #{tpu_custom_call.1} parent=19 // pred_fallthru
          _
      $region20: #{tpu_custom_call.1} parent=5 // pred_fallthru
        _
      %p129 = scmp.le.s32.totalorder 1, %s15
      %p130 = scmp.lt.s32.totalorder %s15, 3
      %p131 = pnand %p129, %p130
      %p132 = pneg %p131
      // Predicated region
      $region25: #{tpu_custom_call.1} parent=5 // pred_check
        _
      $region26: #{tpu_custom_call.1} parent=5 // pred_check_branch
        %134 = sbr.rel (%p131) target = $region28
      $region27: #{tpu_custom_call.1} parent=5 // pred_region
        %s135 = ssub.s32 %s15, 1
        %s136 = sand.u32 %s49, 1
        %s137 = scalar_lea.sflag [#allocation4], %s136
        %s138 = sand.u32 %s49, 1
        %s139 = smul.addr %s138, 16
        %s140 = scalar_lea.vmem [#allocation3], %s139
        // Predicated region
        $region29: #{tpu_custom_call.1} parent=27 // pred_check
          %p141 = pneg %p62
        $region30: #{tpu_custom_call.1} parent=27 // pred_check_branch
          %143 = sbr.rel (%p141) target = $region32
        $region31: #{tpu_custom_call.1} parent=27 // pred_region
          %144 = dma.done %s137, 256
        $region32: #{tpu_custom_call.1} parent=27 // pred_fallthru
          _
        %p145 = pneg %p36
        %p146 = pneg %p33
        %s147 = sand.u32 %s49, 1
        %s148 = scalar_lea.sflag [#allocation4], %s147
        %s149 = sand.u32 %s49, 1
        %s150 = smul.addr %s149, 16
        %s151 = scalar_lea.vmem [#allocation3], %s150
        %p152 = pneg %p62
        %p153 = pneg %p59
        %p154 = pneg %p88
        %p155 = pneg %p85
        %s156 = sand.u32 %s75, 1
        %s157 = scalar_lea.sflag [#allocation5], %s156
        %s158 = sand.u32 %s75, 1
        %s159 = smul.addr %s158, 16
        %s160 = scalar_lea.vmem [#allocation6], %s159
        %s161 = sld [smem:[#allocation2]]
        %s162 = ssub.f32 0.0, %s161
        %v163 = vld [vmem:[%s140] sm:$0xff]
        %v164 = vld [vmem:[%s140 + $0x8] sm:$0xff]
        %v165 = vstv %s162
        %v166 = vmul.f32 %v165, %v163
        %v167 = vmul.f32 %v165, %v164
        %168 = vst [vmem:[%s160] sm:$0xff] %v166
        %169 = vst [vmem:[%s160 + $0x8] sm:$0xff] %v167
        %s170 = sand.u32 %s75, 1
        %s171 = scalar_lea.sflag [#allocation5], %s170
        %s172 = sand.u32 %s75, 1
        %s173 = smul.addr %s172, 16
        %s174 = scalar_lea.vmem [#allocation6], %s173
        // Predicated region
        $region33: #{tpu_custom_call.1} parent=27 // pred_check
          %p175 = pneg %p85
        $region34: #{tpu_custom_call.1} parent=27 // pred_check_branch
          %177 = sbr.rel (%p175) target = $region36
        $region35: #{tpu_custom_call.1} parent=27 // pred_region
          %s179 = ssub.s32 256, 256
          %180 = vsyncadd %s171, %s179
          %s181 = smul.addr %s20, 2
          %s182 = smul.addr %s181, 128
          %s183 = scalar_lea.hbm %s2, %s182
          %s185 = sshll.u32 %s174, 4
          %s186 = int_to_ptr.vmem [resolvable:$true] %s185
          %188 = dma.vmem_to_hbm [thread:$0]  %s186, 256, %s183, %s171
        $region36: #{tpu_custom_call.1} parent=27 // pred_fallthru
          _
      $region28: #{tpu_custom_call.1} parent=5 // pred_fallthru
        _
      %p189 = scmp.le.s32.totalorder 2, %s15
      // Predicated region
      $region37: #{tpu_custom_call.1} parent=5 // pred_check
        %p190 = pneg %p189
      $region38: #{tpu_custom_call.1} parent=5 // pred_check_branch
        %192 = sbr.rel (%p190) target = $region40
      $region39: #{tpu_custom_call.1} parent=5 // pred_region
        %s193 = ssub.s32 %s15, 2
        // Predicated region
        $region41: #{tpu_custom_call.1} parent=39 // pred_check
          %p194 = pneg %p91
        $region42: #{tpu_custom_call.1} parent=39 // pred_check_branch
          %196 = sbr.rel (%p194) target = $region44
        $region43: #{tpu_custom_call.1} parent=39 // pred_region
          %s197 = sand.u32 %s76, 1
          %s198 = scalar_lea.sflag [#allocation5], %s197
          %s199 = sand.u32 %s76, 1
          %s200 = smul.addr %s199, 16
          %s201 = scalar_lea.vmem [#allocation6], %s200
          %202 = dma.done %s198, 256
        $region44: #{tpu_custom_call.1} parent=39 // pred_fallthru
          _
      $region40: #{tpu_custom_call.1} parent=5 // pred_fallthru
        _
    $region6: #{tpu_custom_call.1} parent=1 // loop_footer
      %s19 = sadd.s32 1, %s15
    $region7: #{tpu_custom_call.1} parent=1 // loop_footer_branch
      %14 = sbr.rel target = $region3
    $region8: #{tpu_custom_call.1} parent=1 // loop_exit
      _
    %203 = vsyncpa [#allocation4], 1
    %s204 = scalar_lea.sflag [#allocation4], 1
    %205 = vsyncpa %s204, 1
    %206 = vsyncpa [#allocation5], 1
    %s207 = scalar_lea.sflag [#allocation5], 1
    %208 = vsyncpa %s207, 1

</llo_original>
